<compile_context>
chip_gen: v6e
topology: v6e:2x2x1
jax: 0.10.0
libtpu: 0.0.40
codegen_flags: <defaults>
</compile_context>

<pallas_src>
import functools

import jax
import jax.numpy as jnp
from jax.experimental import pallas as pl
from jax.experimental.pallas import tpu as pltpu


def _attn_dropout_kernel(q_ref, k_ref, v_ref, u_ref, o_ref,
                         *, scaling_factor, dropout_p):
    q = q_ref[...]            # (TB, S, D)
    k = k_ref[...]            # (TB, S, D)
    v = v_ref[...]            # (TB, S, D)

    # --- scores: q @ k^T (contracted on last axis, no transpose), scaled ----
    s = jnp.einsum("bqd,bkd->bqk", q, k,
                   preferred_element_type=jnp.float32) * scaling_factor

    # --- softmax over last axis ---------------------------------------------
    m = jnp.max(s, axis=-1, keepdims=True)
    e = jnp.exp(s - m)
    denom = jnp.sum(e, axis=-1, keepdims=True)
    sm = e / denom

    # --- dropout (training semantics: zero with prob p, scale by 1/(1-p)) ---
    if dropout_p > 0.0:
        scale = 0.0 if dropout_p >= 1.0 else 1.0 / (1.0 - dropout_p)
        keep = u_ref[...] >= jnp.float32(dropout_p)       # (TB, S, S)
        sm = jnp.where(keep, sm * scale, 0.0)

    # --- output: dropped @ v --------------------------------------------------
    out = jnp.einsum("bqk,bkd->bqd", sm.astype(v.dtype), v,
                     preferred_element_type=jnp.float32)
    o_ref[...] = out.astype(o_ref.dtype)


def attn_dropout(q, k, v, key, *, scaling_factor=0.1, dropout_p=0.5):
    B, S, D = q.shape

    # Batch block: largest divisor of B up to 64 (bigger DMAs, fewer steps).
    tb = 1
    for cand in (64, 32, 16, 8, 4, 2, 1):
        if cand <= B and B % cand == 0:
            tb = cand
            break

    # Dropout uniforms generated on the host/XLA side (deterministic per key).
    u = jax.random.uniform(key, (B, S, S), dtype=jnp.float32)

    kernel = functools.partial(_attn_dropout_kernel,
                               scaling_factor=scaling_factor,
                               dropout_p=dropout_p)

    return pl.pallas_call(
        kernel,
        out_shape=jax.ShapeDtypeStruct((B, S, D), q.dtype),
        grid_spec=pltpu.PrefetchScalarGridSpec(
            num_scalar_prefetch=0,
            grid=(B // tb,),
            in_specs=[
                pl.BlockSpec((tb, S, D), lambda b: (b, 0, 0)),
                pl.BlockSpec((tb, S, D), lambda b: (b, 0, 0)),
                pl.BlockSpec((tb, S, D), lambda b: (b, 0, 0)),
                pl.BlockSpec((tb, S, S), lambda b: (b, 0, 0)),
            ],
            out_specs=pl.BlockSpec((tb, S, D), lambda b: (b, 0, 0)),
        ),
        compiler_params=pltpu.CompilerParams(
            dimension_semantics=("parallel",)),
    )(q, k, v, u)


def _reference(q, k, v, u, *, scaling_factor, dropout_p):
    """Pure-JAX reference with the same dropout mask (for correctness check)."""
    s = jnp.einsum("bqd,bkd->bqk", q, k) * scaling_factor
    sm = jax.nn.softmax(s, axis=-1)
    if dropout_p > 0.0:
        scale = 0.0 if dropout_p >= 1.0 else 1.0 / (1.0 - dropout_p)
        sm = jnp.where(u >= dropout_p, sm * scale, 0.0)
    return jnp.einsum("bqk,bkd->bqd", sm, v)


if __name__ == "__main__":
    key = jax.random.PRNGKey(0)
    kq, kk, kv, kd = jax.random.split(key, 4)
    # Shapes follow the module's example inputs: (1, 8, 1024)
    B, S, D = 1, 8, 1024
    q = jax.random.normal(kq, (B, S, D), dtype=jnp.float32)
    k = jax.random.normal(kk, (B, S, D), dtype=jnp.float32)
    v = jax.random.normal(kv, (B, S, D), dtype=jnp.float32)

    out = attn_dropout(q, k, v, kd, scaling_factor=0.1, dropout_p=0.5)
    out = jax.block_until_ready(out)

    assert out.shape == (B, S, D), out.shape
    assert bool(jnp.all(jnp.isfinite(out)))

    # Correctness check against a pure-JAX reference using the same mask.
    u = jax.random.uniform(kd, (B, S, S), dtype=jnp.float32)
    ref = _reference(q, k, v, u, scaling_factor=0.1, dropout_p=0.5)
    assert bool(jnp.allclose(out, ref, atol=1e-5, rtol=1e-5))

    print("KERNEL_OK")
</pallas_src>

<mosaic_0001>
module attributes {stable_mosaic.version = 11 : i64} {
  func.func @_attn_dropout_kernel(%arg0: i32, %arg1: memref<1x8x1024xf32, #tpu.memory_space<vmem>>, %arg2: memref<1x8x1024xf32, #tpu.memory_space<vmem>>, %arg3: memref<1x8x1024xf32, #tpu.memory_space<vmem>>, %arg4: memref<1x8x8xf32, #tpu.memory_space<vmem>>, %arg5: memref<1x8x1024xf32, #tpu.memory_space<vmem>>) attributes {dimension_semantics = [#tpu.dimension_semantics<parallel>], iteration_bounds = array<i64: 1>, scalar_prefetch = 0 : i64, scratch_operands = 0 : i64, tpu.core_type = #tpu.core_type<tc>, window_params = [{transform_indices = @transform_0, window_bounds = array<i64: 1, 8, 1024>}, {transform_indices = @transform_1, window_bounds = array<i64: 1, 8, 1024>}, {transform_indices = @transform_2, window_bounds = array<i64: 1, 8, 1024>}, {transform_indices = @transform_3, window_bounds = array<i64: 1, 8, 8>}, {transform_indices = @transform_4, window_bounds = array<i64: 1, 8, 1024>}]} {
    %c0 = arith.constant 0 : index
    %c0_0 = arith.constant 0 : index
    %c0_1 = arith.constant 0 : index
    %0 = vector.load %arg1[%c0, %c0_0, %c0_1] : memref<1x8x1024xf32, #tpu.memory_space<vmem>>, vector<1x8x1024xf32>
    %c0_2 = arith.constant 0 : index
    %c0_3 = arith.constant 0 : index
    %c0_4 = arith.constant 0 : index
    %1 = vector.load %arg2[%c0_2, %c0_3, %c0_4] : memref<1x8x1024xf32, #tpu.memory_space<vmem>>, vector<1x8x1024xf32>
    %c0_5 = arith.constant 0 : index
    %c0_6 = arith.constant 0 : index
    %c0_7 = arith.constant 0 : index
    %2 = vector.load %arg3[%c0_5, %c0_6, %c0_7] : memref<1x8x1024xf32, #tpu.memory_space<vmem>>, vector<1x8x1024xf32>
    "tpu.trace_start"() <{level = 10 : i32, message = "bqd,bkd->bqk"}> : () -> ()
    %cst = arith.constant dense<0.000000e+00> : vector<1x8x8xf32>
    %3 = tpu.matmul %0, %1, %cst {dimension_numbers = #tpu.dot_dimension_numbers<[2], [2], [1], [1], [0, 0, 0, 1, 1, 1], [0], [0]>} : vector<1x8x1024xf32>, vector<1x8x1024xf32>, vector<1x8x8xf32> -> vector<1x8x8xf32>
    "tpu.trace_stop"() : () -> ()
    %cst_8 = arith.constant 1.000000e-01 : f32
    %4 = vector.broadcast %cst_8 : f32 to vector<1x8x8xf32>
    %5 = arith.mulf %3, %4 : vector<1x8x8xf32>
    %cst_9 = arith.constant dense<0xFF800000> : vector<1x8xf32>
    %6 = vector.multi_reduction <maximumf>, %5, %cst_9 [2] : vector<1x8x8xf32> to vector<1x8xf32>
    %7 = vector.shape_cast %6 : vector<1x8xf32> to vector<1x8x1xf32>
    %8 = vector.broadcast %7 : vector<1x8x1xf32> to vector<1x8x8xf32>
    %9 = arith.subf %5, %8 : vector<1x8x8xf32>
    %10 = math.exp %9 : vector<1x8x8xf32>
    %cst_10 = arith.constant dense<0.000000e+00> : vector<1x8xf32>
    %11 = vector.multi_reduction <add>, %10, %cst_10 [2] : vector<1x8x8xf32> to vector<1x8xf32>
    %12 = vector.shape_cast %11 : vector<1x8xf32> to vector<1x8x1xf32>
    %13 = vector.broadcast %12 : vector<1x8x1xf32> to vector<1x8x8xf32>
    %14 = arith.divf %10, %13 : vector<1x8x8xf32>
    %c0_11 = arith.constant 0 : index
    %c0_12 = arith.constant 0 : index
    %c0_13 = arith.constant 0 : index
    %15 = vector.load %arg4[%c0_11, %c0_12, %c0_13] : memref<1x8x8xf32, #tpu.memory_space<vmem>>, vector<1x8x8xf32>
    %cst_14 = arith.constant 5.000000e-01 : f32
    %16 = vector.broadcast %cst_14 : f32 to vector<1x8x8xf32>
    %17 = arith.cmpf oge, %15, %16 : vector<1x8x8xf32>
    %cst_15 = arith.constant 2.000000e+00 : f32
    %18 = vector.broadcast %cst_15 : f32 to vector<1x8x8xf32>
    %19 = arith.mulf %14, %18 : vector<1x8x8xf32>
    %cst_16 = arith.constant 0.000000e+00 : f32
    %20 = vector.broadcast %cst_16 : f32 to vector<1x8x8xf32>
    %21 = arith.select %17, %19, %20 : vector<1x8x8xi1>, vector<1x8x8xf32>
    "tpu.trace_start"() <{level = 10 : i32, message = "bqk,bkd->bqd"}> : () -> ()
    %cst_17 = arith.constant dense<0.000000e+00> : vector<1x8x1024xf32>
    %22 = tpu.matmul %21, %2, %cst_17 {dimension_numbers = #tpu.dot_dimension_numbers<[2], [1], [1], [2], [0, 0, 0, 1, 1, 2], [0], [0]>} : vector<1x8x8xf32>, vector<1x8x1024xf32>, vector<1x8x1024xf32> -> vector<1x8x1024xf32>
    "tpu.trace_stop"() : () -> ()
    %c0_18 = arith.constant 0 : index
    %c0_19 = arith.constant 0 : index
    %c0_20 = arith.constant 0 : index
    %23 = vector.load %arg5[%c0_18, %c0_19, %c0_20] : memref<1x8x1024xf32, #tpu.memory_space<vmem>>, vector<1x8x1024xf32>
    tpu.vector_store %arg5[%c0_18, %c0_19, %c0_20], %22 {strides = array<i32>} : memref<1x8x1024xf32, #tpu.memory_space<vmem>>, vector<1x8x1024xf32>,
    return
  }
  func.func @transform_0(%arg0: i32) -> (i32, i32, i32) {
    %c0_i32 = arith.constant 0 : i32
    %c0_i32_0 = arith.constant 0 : i32
    %c0_i32_1 = arith.constant 0 : i32
    return %arg0, %c0_i32, %c0_i32_0 : i32, i32, i32
  }
  func.func @transform_1(%arg0: i32) -> (i32, i32, i32) {
    %c0_i32 = arith.constant 0 : i32
    %c0_i32_0 = arith.constant 0 : i32
    %c0_i32_1 = arith.constant 0 : i32
    return %arg0, %c0_i32, %c0_i32_0 : i32, i32, i32
  }
  func.func @transform_2(%arg0: i32) -> (i32, i32, i32) {
    %c0_i32 = arith.constant 0 : i32
    %c0_i32_0 = arith.constant 0 : i32
    %c0_i32_1 = arith.constant 0 : i32
    return %arg0, %c0_i32, %c0_i32_0 : i32, i32, i32
  }
  func.func @transform_3(%arg0: i32) -> (i32, i32, i32) {
    %c0_i32 = arith.constant 0 : i32
    %c0_i32_0 = arith.constant 0 : i32
    %c0_i32_1 = arith.constant 0 : i32
    return %arg0, %c0_i32, %c0_i32_0 : i32, i32, i32
  }
  func.func @transform_4(%arg0: i32) -> (i32, i32, i32) {
    %c0_i32 = arith.constant 0 : i32
    %c0_i32_0 = arith.constant 0 : i32
    %c0_i32_1 = arith.constant 0 : i32
    return %arg0, %c0_i32, %c0_i32_0 : i32, i32, i32
  }
}

</mosaic_0001>

<llo_original>
// kernel: tpu_custom_call.1
$region0: #{tpu_custom_call.1}
  #allocation0 [shape = 'u32[]', space=smem, size = 0x4, offset = 0x4, fixed_abs, tag = 'smem constant byte address 0x4 - core index']
  #allocation1 [shape = 'u32[144,128]{1,0:T(1,128)}', space=vmem, size = 0x12000, scoped, tag = 'internal scratch']
  %s0 = inlined_call_operand.hbm [shape: f32[1,8,1024], index: 0, kind: input, shape index: {}]
  %s1 = inlined_call_operand.hbm [shape: f32[1,8,1024], index: 1, kind: input, shape index: {}]
  %s2 = inlined_call_operand.hbm [shape: f32[1,8,1024], index: 2, kind: input, shape index: {}]
  %s3 = inlined_call_operand.hbm [shape: f32[1,8,8], index: 3, kind: input, shape index: {}]
  %s4 = inlined_call_operand.hbm [shape: f32[1,8,1024], index: 4, kind: output, shape index: {}]
  %s5 = sld [smem:[#allocation0]]
  $region42: #{tpu_custom_call.1} parent=0
    _
  %s7 = ssub.s32 1, %s5
  %s8 = scalar_select 0, %s7, %s5
  $region1: #{tpu_custom_call.1} parent=0
    #allocation2 [shape = 'u8[32768]{0}', space=vmem, size = 0x8000, scoped, tag = 'input window, operand 0, single buffered']
    #allocation3 [shape = 's32[1]{0}', space=sflag, size = 0x4, scoped, tag = 'scoped memory for tpu_custom_call.1']
    #allocation4 [shape = 's32[1]{0}', space=sflag, size = 0x4, scoped, tag = 'scoped memory for tpu_custom_call.1']
    #allocation5 [shape = 'u8[32768]{0}', space=vmem, size = 0x8000, scoped, tag = 'input window, operand 1, single buffered']
    #allocation6 [shape = 's32[1]{0}', space=sflag, size = 0x4, scoped, tag = 'scoped memory for tpu_custom_call.1']
    #allocation7 [shape = 'u8[32768]{0}', space=vmem, size = 0x8000, scoped, tag = 'input window, operand 2, single buffered']
    #allocation8 [shape = 'u8[4096]{0}', space=vmem, size = 0x1000, scoped, tag = 'input window, operand 3, single buffered']
    #allocation9 [shape = 's32[1]{0}', space=sflag, size = 0x4, scoped, tag = 'scoped memory for tpu_custom_call.1']
    #allocation10 [shape = 'u8[32768]{0}', space=vmem, size = 0x8000, scoped, tag = 'output window, operand 0, single buffered']
    %9 = vsyncpa [#allocation3], 0
    %10 = vsyncpa [#allocation6], 0
    %11 = vsyncpa [#allocation9], 0
    %12 = vsyncpa [#allocation4], 0
    // Predicated region
    $region2: #{tpu_custom_call.1} parent=1 // pred_check
      _
    $region3: #{tpu_custom_call.1} parent=1 // pred_check_branch
      %14 = sbr.rel (0) target = $region5
    $region4: #{tpu_custom_call.1} parent=1 // pred_region
      %s16 = ssub.s32 1024, 1024
      %17 = vsyncadd [#allocation3], %s16
      %s19 = sshll.u32 [#allocation2], 4
      %s20 = int_to_ptr.vmem [resolvable:$true] %s19
      %22 = dma.hbm_to_vmem [thread:$0]  %s0, 1024, %s20, [#allocation3]
    $region5: #{tpu_custom_call.1} parent=1 // pred_fallthru
      _
    // Predicated region
    $region6: #{tpu_custom_call.1} parent=1 // pred_check
      _
    $region7: #{tpu_custom_call.1} parent=1 // pred_check_branch
      %24 = sbr.rel (0) target = $region9
    $region8: #{tpu_custom_call.1} parent=1 // pred_region
      %s26 = ssub.s32 1024, 1024
      %27 = vsyncadd [#allocation6], %s26
      %s29 = sshll.u32 [#allocation5], 4
      %s30 = int_to_ptr.vmem [resolvable:$true] %s29
      %32 = dma.hbm_to_vmem [thread:$0]  %s1, 1024, %s30, [#allocation6]
    $region9: #{tpu_custom_call.1} parent=1 // pred_fallthru
      _
    // Predicated region
    $region10: #{tpu_custom_call.1} parent=1 // pred_check
      _
    $region11: #{tpu_custom_call.1} parent=1 // pred_check_branch
      %34 = sbr.rel (0) target = $region13
    $region12: #{tpu_custom_call.1} parent=1 // pred_region
      %s36 = ssub.s32 1024, 1024
      %37 = vsyncadd [#allocation6], %s36
      %s39 = sshll.u32 [#allocation7], 4
      %s40 = int_to_ptr.vmem [resolvable:$true] %s39
      %42 = dma.hbm_to_vmem [thread:$0]  %s2, 1024, %s40, [#allocation6]
    $region13: #{tpu_custom_call.1} parent=1 // pred_fallthru
      _
    // Predicated region
    $region14: #{tpu_custom_call.1} parent=1 // pred_check
      _
    $region15: #{tpu_custom_call.1} parent=1 // pred_check_branch
      %44 = sbr.rel (0) target = $region17
    $region16: #{tpu_custom_call.1} parent=1 // pred_region
      %s46 = ssub.s32 128, 128
      %47 = vsyncadd [#allocation9], %s46
      %s49 = sshll.u32 [#allocation8], 4
      %s50 = int_to_ptr.vmem [resolvable:$true] %s49
      %52 = dma.hbm_to_vmem [thread:$0]  %s3, 128, %s50, [#allocation9]
    $region17: #{tpu_custom_call.1} parent=1 // pred_fallthru
      _
    // Predicated region
    $region18: #{tpu_custom_call.1} parent=1 // pred_check
      _
    $region19: #{tpu_custom_call.1} parent=1 // pred_check_branch
      %54 = sbr.rel (0) target = $region21
    $region20: #{tpu_custom_call.1} parent=1 // pred_region
      %55 = dma.done [#allocation3], 1024
    $region21: #{tpu_custom_call.1} parent=1 // pred_fallthru
      _
    // Predicated region
    $region22: #{tpu_custom_call.1} parent=1 // pred_check
      _
    $region23: #{tpu_custom_call.1} parent=1 // pred_check_branch
      %57 = sbr.rel (0) target = $region25
    $region24: #{tpu_custom_call.1} parent=1 // pred_region
      %58 = dma.done [#allocation6], 1024
    $region25: #{tpu_custom_call.1} parent=1 // pred_fallthru
      _
    // Predicated region
    $region26: #{tpu_custom_call.1} parent=1 // pred_check
      _
    $region27: #{tpu_custom_call.1} parent=1 // pred_check_branch
      %60 = sbr.rel (0) target = $region29
    $region28: #{tpu_custom_call.1} parent=1 // pred_region
      %61 = dma.done [#allocation6], 1024
    $region29: #{tpu_custom_call.1} parent=1 // pred_fallthru
      _
    // Predicated region
    $region30: #{tpu_custom_call.1} parent=1 // pred_check
      _
    $region31: #{tpu_custom_call.1} parent=1 // pred_check_branch
      %63 = sbr.rel (0) target = $region33
    $region32: #{tpu_custom_call.1} parent=1 // pred_region
      %64 = dma.done [#allocation9], 128
    $region33: #{tpu_custom_call.1} parent=1 // pred_fallthru
      _
    %v65 = vld [vmem:[#allocation2] sm:$0xff]
    %v66 = vld [vmem:[#allocation2 + $0x8] sm:$0xff]
    %v67 = vld [vmem:[#allocation2 + $0x10] sm:$0xff]
    %v68 = vld [vmem:[#allocation2 + $0x18] sm:$0xff]
    %v69 = vld [vmem:[#allocation2 + $0x20] sm:$0xff]
    %v70 = vld [vmem:[#allocation2 + $0x28] sm:$0xff]
    %v71 = vld [vmem:[#allocation2 + $0x30] sm:$0xff]
    %v72 = vld [vmem:[#allocation2 + $0x38] sm:$0xff]
    %v73 = vld [vmem:[#allocation5] sm:$0xff]
    %v74 = vld [vmem:[#allocation5 + $0x8] sm:$0xff]
    %v75 = vld [vmem:[#allocation5 + $0x10] sm:$0xff]
    %v76 = vld [vmem:[#allocation5 + $0x18] sm:$0xff]
    %v77 = vld [vmem:[#allocation5 + $0x20] sm:$0xff]
    %v78 = vld [vmem:[#allocation5 + $0x28] sm:$0xff]
    %v79 = vld [vmem:[#allocation5 + $0x30] sm:$0xff]
    %v80 = vld [vmem:[#allocation5 + $0x38] sm:$0xff]
    %v81 = vld [vmem:[#allocation7] sm:$0xff]
    %v82 = vld [vmem:[#allocation7 + $0x8] sm:$0xff]
    %v83 = vld [vmem:[#allocation7 + $0x10] sm:$0xff]
    %v84 = vld [vmem:[#allocation7 + $0x18] sm:$0xff]
    %v85 = vld [vmem:[#allocation7 + $0x20] sm:$0xff]
    %v86 = vld [vmem:[#allocation7 + $0x28] sm:$0xff]
    %v87 = vld [vmem:[#allocation7 + $0x30] sm:$0xff]
    %v88 = vld [vmem:[#allocation7 + $0x38] sm:$0xff]
    %89 = vmatprep.subr.mxu0 0.0
    %90 = vmatpush1.xpose.msra.mxu0 0.0
    %91 = vmatprep.subr.mxu0 0.0
    %92 = vmatpush1.xpose.msra.mxu0 0.0
    %93 = vmatprep.subr.mxu0 0.0
    %94 = vmatpush1.xpose.msra.mxu0 0.0
    %95 = vmatprep.subr.mxu0 0.0
    %96 = vmatpush1.xpose.msra.mxu0 0.0
    %97 = vmatprep.subr.mxu0 0.0
    %98 = vmatpush1.xpose.msra.mxu0 0.0
    %99 = vmatprep.subr.mxu0 0.0
    %100 = vmatpush1.xpose.msra.mxu0 0.0
    %101 = vmatprep.subr.mxu0 0.0
    %102 = vmatpush1.xpose.msra.mxu0 0.0
    %103 = vmatprep.subr.mxu0 0.0
    %104 = vmatpush1.xpose.msra.mxu0 0.0
    %105 = vmatprep.subr.mxu0 0.0
    %106 = vmatpush1.xpose.msra.mxu0 0.0
    %107 = vmatprep.subr.mxu0 0.0
    %108 = vmatpush1.xpose.msra.mxu0 0.0
    %109 = vmatprep.subr.mxu0 0.0
    %110 = vmatpush1.xpose.msra.mxu0 0.0
    %111 = vmatprep.subr.mxu0 0.0
    %112 = vmatpush1.xpose.msra.mxu0 0.0
    %113 = vmatprep.subr.mxu0 0.0
    %114 = vmatpush1.xpose.msra.mxu0 0.0
    %115 = vmatprep.subr.mxu0 0.0
    %116 = vmatpush1.xpose.msra.mxu0 0.0
    %117 = vmatprep.subr.mxu0 0.0
    %118 = vmatpush1.xpose.msra.mxu0 0.0
    %119 = vmatprep.subr.mxu0 %v74
    %120 = vmatpush1.xpose.msra.mxu0 %v73
    %121 = vmatprep.subr.mxu0 0.0
    %122 = vmatpush2.xpose.msra.mxu0 0.0
    %123 = vmatprep.subr.mxu0 0.0
    %124 = vmatpush2.xpose.msra.mxu0 0.0
    %125 = vmatprep.subr.mxu0 0.0
    %126 = vmatpush2.xpose.msra.mxu0 0.0
    %127 = vmatprep.subr.mxu0 0.0
    %128 = vmatpush2.xpose.msra.mxu0 0.0
    %129 = vmatprep.subr.mxu0 0.0
    %130 = vmatpush2.xpose.msra.mxu0 0.0
    %131 = vmatprep.subr.mxu0 0.0
    %132 = vmatpush2.xpose.msra.mxu0 0.0
    %133 = vmatprep.subr.mxu0 0.0
    %134 = vmatpush2.xpose.msra.mxu0 0.0
    %135 = vmatprep.subr.mxu0 0.0
    %136 = vmatpush2.xpose.msra.mxu0 0.0
    %137 = vmatprep.subr.mxu0 0.0
    %138 = vmatpush2.xpose.msra.mxu0 0.0
    %139 = vmatprep.subr.mxu0 0.0
    %140 = vmatpush2.xpose.msra.mxu0 0.0
    %141 = vmatprep.subr.mxu0 0.0
    %142 = vmatpush2.xpose.msra.mxu0 0.0
    %143 = vmatprep.subr.mxu0 0.0
    %144 = vmatpush2.xpose.msra.mxu0 0.0
    %145 = vmatprep.subr.mxu0 0.0
    %146 = vmatpush2.xpose.msra.mxu0 0.0
    %147 = vmatprep.subr.mxu0 0.0
    %148 = vmatpush2.xpose.msra.mxu0 0.0
    %149 = vmatprep.subr.mxu0 0.0
    %150 = vmatpush2.xpose.msra.mxu0 0.0
    %151 = vmatprep.subr.mxu0 0.0
    %152 = vmatpush2.xpose.msra.mxu0 0.0
    %153 = vmatprep.mubr.f32.mxu0 %v66
    %154 = vmatmul.mubr.f32.gmra.mxu0 %v65
    %v155 = vpop.f32.mrf.mxu0
    %v156 = vadd.f32 0.0, %v155
    %v157 = vpop.f32.mrf.mxu0
    %158 = vdwg.mxu0
    %159 = vmatprep.subr.mxu0 0.0
    %160 = vmatpush1.xpose.msra.mxu0 0.0
    %161 = vmatprep.subr.mxu0 0.0
    %162 = vmatpush1.xpose.msra.mxu0 0.0
    %163 = vmatprep.subr.mxu0 0.0
    %164 = vmatpush1.xpose.msra.mxu0 0.0
    %165 = vmatprep.subr.mxu0 0.0
    %166 = vmatpush1.xpose.msra.mxu0 0.0
    %167 = vmatprep.subr.mxu0 0.0
    %168 = vmatpush1.xpose.msra.mxu0 0.0
    %169 = vmatprep.subr.mxu0 0.0
    %170 = vmatpush1.xpose.msra.mxu0 0.0
    %171 = vmatprep.subr.mxu0 0.0
    %172 = vmatpush1.xpose.msra.mxu0 0.0
    %173 = vmatprep.subr.mxu0 0.0
    %174 = vmatpush1.xpose.msra.mxu0 0.0
    %175 = vmatprep.subr.mxu0 0.0
    %176 = vmatpush1.xpose.msra.mxu0 0.0
    %177 = vmatprep.subr.mxu0 0.0
    %178 = vmatpush1.xpose.msra.mxu0 0.0
    %179 = vmatprep.subr.mxu0 0.0
    %180 = vmatpush1.xpose.msra.mxu0 0.0
    %181 = vmatprep.subr.mxu0 0.0
    %182 = vmatpush1.xpose.msra.mxu0 0.0
    %183 = vmatprep.subr.mxu0 0.0
    %184 = vmatpush1.xpose.msra.mxu0 0.0
    %185 = vmatprep.subr.mxu0 0.0
    %186 = vmatpush1.xpose.msra.mxu0 0.0
    %187 = vmatprep.subr.mxu0 0.0
    %188 = vmatpush1.xpose.msra.mxu0 0.0
    %189 = vmatprep.subr.mxu0 %v76
    %190 = vmatpush1.xpose.msra.mxu0 %v75
    %191 = vmatprep.subr.mxu0 0.0
    %192 = vmatpush2.xpose.msra.mxu0 0.0
    %193 = vmatprep.subr.mxu0 0.0
    %194 = vmatpush2.xpose.msra.mxu0 0.0
    %195 = vmatprep.subr.mxu0 0.0
    %196 = vmatpush2.xpose.msra.mxu0 0.0
    %197 = vmatprep.subr.mxu0 0.0
    %198 = vmatpush2.xpose.msra.mxu0 0.0
    %199 = vmatprep.subr.mxu0 0.0
    %200 = vmatpush2.xpose.msra.mxu0 0.0
    %201 = vmatprep.subr.mxu0 0.0
    %202 = vmatpush2.xpose.msra.mxu0 0.0
    %203 = vmatprep.subr.mxu0 0.0
    %204 = vmatpush2.xpose.msra.mxu0 0.0
    %205 = vmatprep.subr.mxu0 0.0
    %206 = vmatpush2.xpose.msra.mxu0 0.0
    %207 = vmatprep.subr.mxu0 0.0
    %208 = vmatpush2.xpose.msra.mxu0 0.0
    %209 = vmatprep.subr.mxu0 0.0
    %210 = vmatpush2.xpose.msra.mxu0 0.0
    %211 = vmatprep.subr.mxu0 0.0
    %212 = vmatpush2.xpose.msra.mxu0 0.0
    %213 = vmatprep.subr.mxu0 0.0
    %214 = vmatpush2.xpose.msra.mxu0 0.0
    %215 = vmatprep.subr.mxu0 0.0
    %216 = vmatpush2.xpose.msra.mxu0 0.0
    %217 = vmatprep.subr.mxu0 0.0
    %218 = vmatpush2.xpose.msra.mxu0 0.0
    %219 = vmatprep.subr.mxu0 0.0
    %220 = vmatpush2.xpose.msra.mxu0 0.0
    %221 = vmatprep.subr.mxu0 0.0
    %222 = vmatpush2.xpose.msra.mxu0 0.0
    %223 = vmatprep.mubr.f32.mxu0 %v68
    %224 = vmatmul.mubr.f32.gmra.mxu0 %v67
    %v225 = vpop.f32.mrf.mxu0
    %v226 = vadd.f32 %v156, %v225
    %v227 = vpop.f32.mrf.mxu0
    %228 = vdwg.mxu0
    %229 = vmatprep.subr.mxu0 0.0
    %230 = vmatpush1.xpose.msra.mxu0 0.0
    %231 = vmatprep.subr.mxu0 0.0
    %232 = vmatpush1.xpose.msra.mxu0 0.0
    %233 = vmatprep.subr.mxu0 0.0
    %234 = vmatpush1.xpose.msra.mxu0 0.0
    %235 = vmatprep.subr.mxu0 0.0
    %236 = vmatpush1.xpose.msra.mxu0 0.0
    %237 = vmatprep.subr.mxu0 0.0
    %238 = vmatpush1.xpose.msra.mxu0 0.0
    %239 = vmatprep.subr.mxu0 0.0
    %240 = vmatpush1.xpose.msra.mxu0 0.0
    %241 = vmatprep.subr.mxu0 0.0
    %242 = vmatpush1.xpose.msra.mxu0 0.0
    %243 = vmatprep.subr.mxu0 0.0
    %244 = vmatpush1.xpose.msra.mxu0 0.0
    %245 = vmatprep.subr.mxu0 0.0
    %246 = vmatpush1.xpose.msra.mxu0 0.0
    %247 = vmatprep.subr.mxu0 0.0
    %248 = vmatpush1.xpose.msra.mxu0 0.0
    %249 = vmatprep.subr.mxu0 0.0
    %250 = vmatpush1.xpose.msra.mxu0 0.0
    %251 = vmatprep.subr.mxu0 0.0
    %252 = vmatpush1.xpose.msra.mxu0 0.0
    %253 = vmatprep.subr.mxu0 0.0
    %254 = vmatpush1.xpose.msra.mxu0 0.0
    %255 = vmatprep.subr.mxu0 0.0
    %256 = vmatpush1.xpose.msra.mxu0 0.0
    %257 = vmatprep.subr.mxu0 0.0
    %258 = vmatpush1.xpose.msra.mxu0 0.0
    %259 = vmatprep.subr.mxu0 %v78
    %260 = vmatpush1.xpose.msra.mxu0 %v77
    %261 = vmatprep.subr.mxu0 0.0
    %262 = vmatpush2.xpose.msra.mxu0 0.0
    %263 = vmatprep.subr.mxu0 0.0
    %264 = vmatpush2.xpose.msra.mxu0 0.0
    %265 = vmatprep.subr.mxu0 0.0
    %266 = vmatpush2.xpose.msra.mxu0 0.0
    %267 = vmatprep.subr.mxu0 0.0
    %268 = vmatpush2.xpose.msra.mxu0 0.0
    %269 = vmatprep.subr.mxu0 0.0
    %270 = vmatpush2.xpose.msra.mxu0 0.0
    %271 = vmatprep.subr.mxu0 0.0
    %272 = vmatpush2.xpose.msra.mxu0 0.0
    %273 = vmatprep.subr.mxu0 0.0
    %274 = vmatpush2.xpose.msra.mxu0 0.0
    %275 = vmatprep.subr.mxu0 0.0
    %276 = vmatpush2.xpose.msra.mxu0 0.0
    %277 = vmatprep.subr.mxu0 0.0
    %278 = vmatpush2.xpose.msra.mxu0 0.0
    %279 = vmatprep.subr.mxu0 0.0
    %280 = vmatpush2.xpose.msra.mxu0 0.0
    %281 = vmatprep.subr.mxu0 0.0
    %282 = vmatpush2.xpose.msra.mxu0 0.0
    %283 = vmatprep.subr.mxu0 0.0
    %284 = vmatpush2.xpose.msra.mxu0 0.0
    %285 = vmatprep.subr.mxu0 0.0
    %286 = vmatpush2.xpose.msra.mxu0 0.0
    %287 = vmatprep.subr.mxu0 0.0
    %288 = vmatpush2.xpose.msra.mxu0 0.0
    %289 = vmatprep.subr.mxu0 0.0
    %290 = vmatpush2.xpose.msra.mxu0 0.0
    %291 = vmatprep.subr.mxu0 0.0
    %292 = vmatpush2.xpose.msra.mxu0 0.0
    %293 = vmatprep.mubr.f32.mxu0 %v70
    %294 = vmatmul.mubr.f32.gmra.mxu0 %v69
    %v295 = vpop.f32.mrf.mxu0
    %v296 = vadd.f32 %v226, %v295
    %v297 = vpop.f32.mrf.mxu0
    %298 = vdwg.mxu0
    %299 = vmatprep.subr.mxu0 0.0
    %300 = vmatpush1.xpose.msra.mxu0 0.0
    %301 = vmatprep.subr.mxu0 0.0
    %302 = vmatpush1.xpose.msra.mxu0 0.0
    %303 = vmatprep.subr.mxu0 0.0
    %304 = vmatpush1.xpose.msra.mxu0 0.0
    %305 = vmatprep.subr.mxu0 0.0
    %306 = vmatpush1.xpose.msra.mxu0 0.0
    %307 = vmatprep.subr.mxu0 0.0
    %308 = vmatpush1.xpose.msra.mxu0 0.0
    %309 = vmatprep.subr.mxu0 0.0
    %310 = vmatpush1.xpose.msra.mxu0 0.0
    %311 = vmatprep.subr.mxu0 0.0
    %312 = vmatpush1.xpose.msra.mxu0 0.0
    %313 = vmatprep.subr.mxu0 0.0
    %314 = vmatpush1.xpose.msra.mxu0 0.0
    %315 = vmatprep.subr.mxu0 0.0
    %316 = vmatpush1.xpose.msra.mxu0 0.0
    %317 = vmatprep.subr.mxu0 0.0
    %318 = vmatpush1.xpose.msra.mxu0 0.0
    %319 = vmatprep.subr.mxu0 0.0
    %320 = vmatpush1.xpose.msra.mxu0 0.0
    %321 = vmatprep.subr.mxu0 0.0
    %322 = vmatpush1.xpose.msra.mxu0 0.0
    %323 = vmatprep.subr.mxu0 0.0
    %324 = vmatpush1.xpose.msra.mxu0 0.0
    %325 = vmatprep.subr.mxu0 0.0
    %326 = vmatpush1.xpose.msra.mxu0 0.0
    %327 = vmatprep.subr.mxu0 0.0
    %328 = vmatpush1.xpose.msra.mxu0 0.0
    %329 = vmatprep.subr.mxu0 %v80
    %330 = vmatpush1.xpose.msra.mxu0 %v79
    %331 = vmatprep.subr.mxu0 0.0
    %332 = vmatpush2.xpose.msra.mxu0 0.0
    %333 = vmatprep.subr.mxu0 0.0
    %334 = vmatpush2.xpose.msra.mxu0 0.0
    %335 = vmatprep.subr.mxu0 0.0
    %336 = vmatpush2.xpose.msra.mxu0 0.0
    %337 = vmatprep.subr.mxu0 0.0
    %338 = vmatpush2.xpose.msra.mxu0 0.0
    %339 = vmatprep.subr.mxu0 0.0
    %340 = vmatpush2.xpose.msra.mxu0 0.0
    %341 = vmatprep.subr.mxu0 0.0
    %342 = vmatpush2.xpose.msra.mxu0 0.0
    %343 = vmatprep.subr.mxu0 0.0
    %344 = vmatpush2.xpose.msra.mxu0 0.0
    %345 = vmatprep.subr.mxu0 0.0
    %346 = vmatpush2.xpose.msra.mxu0 0.0
    %347 = vmatprep.subr.mxu0 0.0
    %348 = vmatpush2.xpose.msra.mxu0 0.0
    %349 = vmatprep.subr.mxu0 0.0
    %350 = vmatpush2.xpose.msra.mxu0 0.0
    %351 = vmatprep.subr.mxu0 0.0
    %352 = vmatpush2.xpose.msra.mxu0 0.0
    %353 = vmatprep.subr.mxu0 0.0
    %354 = vmatpush2.xpose.msra.mxu0 0.0
    %355 = vmatprep.subr.mxu0 0.0
    %356 = vmatpush2.xpose.msra.mxu0 0.0
    %357 = vmatprep.subr.mxu0 0.0
    %358 = vmatpush2.xpose.msra.mxu0 0.0
    %359 = vmatprep.subr.mxu0 0.0
    %360 = vmatpush2.xpose.msra.mxu0 0.0
    %361 = vmatprep.subr.mxu0 0.0
    %362 = vmatpush2.xpose.msra.mxu0 0.0
    %363 = vmatprep.mubr.f32.mxu0 %v72
    %364 = vmatmul.mubr.f32.gmra.mxu0 %v71
    %v365 = vpop.f32.mrf.mxu0
    %v366 = vadd.f32 %v296, %v365
    %v367 = vpop.f32.mrf.mxu0
    %368 = vdwg.mxu0
    %v369 = vmul.f32 %v366, 0.1
    %vm370 = vcmask 64512
    %v371 = vsel %vm370, %v369, -inf
    %372 = vmax.xlane.f32.xlu0 %v371
    %v373 = vpop.xlane.xlu0 %372
    %v374 = vsub.f32 %v369, %v373
    %v375 = vmul.f32 %v374, 1.442695
    %v376 = vpow.pop %v375
    %v377 = vsel %vm370, %v376, 0.0
    %378 = vadd.xlane.f32.xlu0 %v377
    %v379 = vpop.xlane.xlu0 %378
    %v380 = vrcp.pop %v379
    %v381 = vmul.f32 %v376, %v380
    %v382 = vld [vmem:[#allocation8] sm:$0xff]
    %vm383 = vcmp.ge.f32.partialorder %v382, 0.5
    %v384 = vmul.f32 %v381, 2.0
    %v385 = vsel %vm383, %v384, 0.0
    %v387 = vsel %vm370, %v385, 0
    %389 = vmatprep.subr.mxu0 0.0
    %390 = vmatpush1.msra.mxu0 0.0
    %391 = vmatprep.subr.mxu0 0.0
    %392 = vmatpush1.msra.mxu0 0.0
    %393 = vmatprep.subr.mxu0 0.0
    %394 = vmatpush1.msra.mxu0 0.0
    %395 = vmatprep.subr.mxu0 0.0
    %396 = vmatpush1.msra.mxu0 0.0
    %397 = vmatprep.subr.mxu0 0.0
    %398 = vmatpush1.msra.mxu0 0.0
    %399 = vmatprep.subr.mxu0 0.0
    %400 = vmatpush1.msra.mxu0 0.0
    %401 = vmatprep.subr.mxu0 0.0
    %402 = vmatpush1.msra.mxu0 0.0
    %403 = vmatprep.subr.mxu0 0.0
    %404 = vmatpush1.msra.mxu0 0.0
    %405 = vmatprep.subr.mxu0 0.0
    %406 = vmatpush1.msra.mxu0 0.0
    %407 = vmatprep.subr.mxu0 0.0
    %408 = vmatpush1.msra.mxu0 0.0
    %409 = vmatprep.subr.mxu0 0.0
    %410 = vmatpush1.msra.mxu0 0.0
    %411 = vmatprep.subr.mxu0 0.0
    %412 = vmatpush1.msra.mxu0 0.0
    %413 = vmatprep.subr.mxu0 0.0
    %414 = vmatpush1.msra.mxu0 0.0
    %415 = vmatprep.subr.mxu0 0.0
    %416 = vmatpush1.msra.mxu0 0.0
    %417 = vmatprep.subr.mxu0 0.0
    %418 = vmatpush1.msra.mxu0 0.0
    %419 = vmatprep.subr.mxu0 %v82
    %420 = vmatpush1.msra.mxu0 %v81
    %421 = vmatprep.subr.mxu0 0.0
    %422 = vmatpush2.msra.mxu0 0.0
    %423 = vmatprep.subr.mxu0 0.0
    %424 = vmatpush2.msra.mxu0 0.0
    %425 = vmatprep.subr.mxu0 0.0
    %426 = vmatpush2.msra.mxu0 0.0
    %427 = vmatprep.subr.mxu0 0.0
    %428 = vmatpush2.msra.mxu0 0.0
    %429 = vmatprep.subr.mxu0 0.0
    %430 = vmatpush2.msra.mxu0 0.0
    %431 = vmatprep.subr.mxu0 0.0
    %432 = vmatpush2.msra.mxu0 0.0
    %433 = vmatprep.subr.mxu0 0.0
    %434 = vmatpush2.msra.mxu0 0.0
    %435 = vmatprep.subr.mxu0 0.0
    %436 = vmatpush2.msra.mxu0 0.0
    %437 = vmatprep.subr.mxu0 0.0
    %438 = vmatpush2.msra.mxu0 0.0
    %439 = vmatprep.subr.mxu0 0.0
    %440 = vmatpush2.msra.mxu0 0.0
    %441 = vmatprep.subr.mxu0 0.0
    %442 = vmatpush2.msra.mxu0 0.0
    %443 = vmatprep.subr.mxu0 0.0
    %444 = vmatpush2.msra.mxu0 0.0
    %445 = vmatprep.subr.mxu0 0.0
    %446 = vmatpush2.msra.mxu0 0.0
    %447 = vmatprep.subr.mxu0 0.0
    %448 = vmatpush2.msra.mxu0 0.0
    %449 = vmatprep.subr.mxu0 0.0
    %450 = vmatpush2.msra.mxu0 0.0
    %451 = vmatprep.subr.mxu0 0.0
    %452 = vmatpush2.msra.mxu0 0.0
    %453 = vmatprep.mubr.f32.mxu0 0.0
    %454 = vmatmul.mubr.f32.gmra.mxu0 %v387
    %v455 = vpop.f32.mrf.mxu0
    %v456 = vadd.f32 0.0, %v455
    %v457 = vpop.f32.mrf.mxu0
    %v458 = vadd.f32 0.0, %v457
    %459 = vdwg.mxu0
    %460 = vmatprep.subr.mxu0 0.0
    %461 = vmatpush1.msra.mxu0 0.0
    %462 = vmatprep.subr.mxu0 0.0
    %463 = vmatpush1.msra.mxu0 0.0
    %464 = vmatprep.subr.mxu0 0.0
    %465 = vmatpush1.msra.mxu0 0.0
    %466 = vmatprep.subr.mxu0 0.0
    %467 = vmatpush1.msra.mxu0 0.0
    %468 = vmatprep.subr.mxu0 0.0
    %469 = vmatpush1.msra.mxu0 0.0
    %470 = vmatprep.subr.mxu0 0.0
    %471 = vmatpush1.msra.mxu0 0.0
    %472 = vmatprep.subr.mxu0 0.0
    %473 = vmatpush1.msra.mxu0 0.0
    %474 = vmatprep.subr.mxu0 0.0
    %475 = vmatpush1.msra.mxu0 0.0
    %476 = vmatprep.subr.mxu0 0.0
    %477 = vmatpush1.msra.mxu0 0.0
    %478 = vmatprep.subr.mxu0 0.0
    %479 = vmatpush1.msra.mxu0 0.0
    %480 = vmatprep.subr.mxu0 0.0
    %481 = vmatpush1.msra.mxu0 0.0
    %482 = vmatprep.subr.mxu0 0.0
    %483 = vmatpush1.msra.mxu0 0.0
    %484 = vmatprep.subr.mxu0 0.0
    %485 = vmatpush1.msra.mxu0 0.0
    %486 = vmatprep.subr.mxu0 0.0
    %487 = vmatpush1.msra.mxu0 0.0
    %488 = vmatprep.subr.mxu0 0.0
    %489 = vmatpush1.msra.mxu0 0.0
    %490 = vmatprep.subr.mxu0 %v84
    %491 = vmatpush1.msra.mxu0 %v83
    %492 = vmatprep.subr.mxu0 0.0
    %493 = vmatpush2.msra.mxu0 0.0
    %494 = vmatprep.subr.mxu0 0.0
    %495 = vmatpush2.msra.mxu0 0.0
    %496 = vmatprep.subr.mxu0 0.0
    %497 = vmatpush2.msra.mxu0 0.0
    %498 = vmatprep.subr.mxu0 0.0
    %499 = vmatpush2.msra.mxu0 0.0
    %500 = vmatprep.subr.mxu0 0.0
    %501 = vmatpush2.msra.mxu0 0.0
    %502 = vmatprep.subr.mxu0 0.0
    %503 = vmatpush2.msra.mxu0 0.0
    %504 = vmatprep.subr.mxu0 0.0
    %505 = vmatpush2.msra.mxu0 0.0
    %506 = vmatprep.subr.mxu0 0.0
    %507 = vmatpush2.msra.mxu0 0.0
    %508 = vmatprep.subr.mxu0 0.0
    %509 = vmatpush2.msra.mxu0 0.0
    %510 = vmatprep.subr.mxu0 0.0
    %511 = vmatpush2.msra.mxu0 0.0
    %512 = vmatprep.subr.mxu0 0.0
    %513 = vmatpush2.msra.mxu0 0.0
    %514 = vmatprep.subr.mxu0 0.0
    %515 = vmatpush2.msra.mxu0 0.0
    %516 = vmatprep.subr.mxu0 0.0
    %517 = vmatpush2.msra.mxu0 0.0
    %518 = vmatprep.subr.mxu0 0.0
    %519 = vmatpush2.msra.mxu0 0.0
    %520 = vmatprep.subr.mxu0 0.0
    %521 = vmatpush2.msra.mxu0 0.0
    %522 = vmatprep.subr.mxu0 0.0
    %523 = vmatpush2.msra.mxu0 0.0
    %524 = vmatprep.mubr.f32.mxu0 0.0
    %525 = vmatmul.mubr.f32.gmra.mxu0 %v387
    %v526 = vpop.f32.mrf.mxu0
    %v527 = vadd.f32 0.0, %v526
    %v528 = vpop.f32.mrf.mxu0
    %v529 = vadd.f32 0.0, %v528
    %530 = vdwg.mxu0
    %531 = vmatprep.subr.mxu0 0.0
    %532 = vmatpush1.msra.mxu0 0.0
    %533 = vmatprep.subr.mxu0 0.0
    %534 = vmatpush1.msra.mxu0 0.0
    %535 = vmatprep.subr.mxu0 0.0
    %536 = vmatpush1.msra.mxu0 0.0
    %537 = vmatprep.subr.mxu0 0.0
    %538 = vmatpush1.msra.mxu0 0.0
    %539 = vmatprep.subr.mxu0 0.0
    %540 = vmatpush1.msra.mxu0 0.0
    %541 = vmatprep.subr.mxu0 0.0
    %542 = vmatpush1.msra.mxu0 0.0
    %543 = vmatprep.subr.mxu0 0.0
    %544 = vmatpush1.msra.mxu0 0.0
    %545 = vmatprep.subr.mxu0 0.0
    %546 = vmatpush1.msra.mxu0 0.0
    %547 = vmatprep.subr.mxu0 0.0
    %548 = vmatpush1.msra.mxu0 0.0
    %549 = vmatprep.subr.mxu0 0.0
    %550 = vmatpush1.msra.mxu0 0.0
    %551 = vmatprep.subr.mxu0 0.0
    %552 = vmatpush1.msra.mxu0 0.0
    %553 = vmatprep.subr.mxu0 0.0
    %554 = vmatpush1.msra.mxu0 0.0
    %555 = vmatprep.subr.mxu0 0.0
    %556 = vmatpush1.msra.mxu0 0.0
    %557 = vmatprep.subr.mxu0 0.0
    %558 = vmatpush1.msra.mxu0 0.0
    %559 = vmatprep.subr.mxu0 0.0
    %560 = vmatpush1.msra.mxu0 0.0
    %561 = vmatprep.subr.mxu0 %v86
    %562 = vmatpush1.msra.mxu0 %v85
    %563 = vmatprep.subr.mxu0 0.0
    %564 = vmatpush2.msra.mxu0 0.0
    %565 = vmatprep.subr.mxu0 0.0
    %566 = vmatpush2.msra.mxu0 0.0
    %567 = vmatprep.subr.mxu0 0.0
    %568 = vmatpush2.msra.mxu0 0.0
    %569 = vmatprep.subr.mxu0 0.0
    %570 = vmatpush2.msra.mxu0 0.0
    %571 = vmatprep.subr.mxu0 0.0
    %572 = vmatpush2.msra.mxu0 0.0
    %573 = vmatprep.subr.mxu0 0.0
    %574 = vmatpush2.msra.mxu0 0.0
    %575 = vmatprep.subr.mxu0 0.0
    %576 = vmatpush2.msra.mxu0 0.0
    %577 = vmatprep.subr.mxu0 0.0
    %578 = vmatpush2.msra.mxu0 0.0
    %579 = vmatprep.subr.mxu0 0.0
    %580 = vmatpush2.msra.mxu0 0.0
    %581 = vmatprep.subr.mxu0 0.0
    %582 = vmatpush2.msra.mxu0 0.0
    %583 = vmatprep.subr.mxu0 0.0
    %584 = vmatpush2.msra.mxu0 0.0
    %585 = vmatprep.subr.mxu0 0.0
    %586 = vmatpush2.msra.mxu0 0.0
    %587 = vmatprep.subr.mxu0 0.0
    %588 = vmatpush2.msra.mxu0 0.0
    %589 = vmatprep.subr.mxu0 0.0
    %590 = vmatpush2.msra.mxu0 0.0
    %591 = vmatprep.subr.mxu0 0.0
    %592 = vmatpush2.msra.mxu0 0.0
    %593 = vmatprep.subr.mxu0 0.0
    %594 = vmatpush2.msra.mxu0 0.0
    %595 = vmatprep.mubr.f32.mxu0 0.0
    %596 = vmatmul.mubr.f32.gmra.mxu0 %v387
    %v597 = vpop.f32.mrf.mxu0
    %v598 = vadd.f32 0.0, %v597
    %v599 = vpop.f32.mrf.mxu0
    %v600 = vadd.f32 0.0, %v599
    %601 = vdwg.mxu0
    %602 = vmatprep.subr.mxu0 0.0
    %603 = vmatpush1.msra.mxu0 0.0
    %604 = vmatprep.subr.mxu0 0.0
    %605 = vmatpush1.msra.mxu0 0.0
    %606 = vmatprep.subr.mxu0 0.0
    %607 = vmatpush1.msra.mxu0 0.0
    %608 = vmatprep.subr.mxu0 0.0
    %609 = vmatpush1.msra.mxu0 0.0
    %610 = vmatprep.subr.mxu0 0.0
    %611 = vmatpush1.msra.mxu0 0.0
    %612 = vmatprep.subr.mxu0 0.0
    %613 = vmatpush1.msra.mxu0 0.0
    %614 = vmatprep.subr.mxu0 0.0
    %615 = vmatpush1.msra.mxu0 0.0
    %616 = vmatprep.subr.mxu0 0.0
    %617 = vmatpush1.msra.mxu0 0.0
    %618 = vmatprep.subr.mxu0 0.0
    %619 = vmatpush1.msra.mxu0 0.0
    %620 = vmatprep.subr.mxu0 0.0
    %621 = vmatpush1.msra.mxu0 0.0
    %622 = vmatprep.subr.mxu0 0.0
    %623 = vmatpush1.msra.mxu0 0.0
    %624 = vmatprep.subr.mxu0 0.0
    %625 = vmatpush1.msra.mxu0 0.0
    %626 = vmatprep.subr.mxu0 0.0
    %627 = vmatpush1.msra.mxu0 0.0
    %628 = vmatprep.subr.mxu0 0.0
    %629 = vmatpush1.msra.mxu0 0.0
    %630 = vmatprep.subr.mxu0 0.0
    %631 = vmatpush1.msra.mxu0 0.0
    %632 = vmatprep.subr.mxu0 %v88
    %633 = vmatpush1.msra.mxu0 %v87
    %634 = vmatprep.subr.mxu0 0.0
    %635 = vmatpush2.msra.mxu0 0.0
    %636 = vmatprep.subr.mxu0 0.0
    %637 = vmatpush2.msra.mxu0 0.0
    %638 = vmatprep.subr.mxu0 0.0
    %639 = vmatpush2.msra.mxu0 0.0
    %640 = vmatprep.subr.mxu0 0.0
    %641 = vmatpush2.msra.mxu0 0.0
    %642 = vmatprep.subr.mxu0 0.0
    %643 = vmatpush2.msra.mxu0 0.0
    %644 = vmatprep.subr.mxu0 0.0
    %645 = vmatpush2.msra.mxu0 0.0
    %646 = vmatprep.subr.mxu0 0.0
    %647 = vmatpush2.msra.mxu0 0.0
    %648 = vmatprep.subr.mxu0 0.0
    %649 = vmatpush2.msra.mxu0 0.0
    %650 = vmatprep.subr.mxu0 0.0
    %651 = vmatpush2.msra.mxu0 0.0
    %652 = vmatprep.subr.mxu0 0.0
    %653 = vmatpush2.msra.mxu0 0.0
    %654 = vmatprep.subr.mxu0 0.0
    %655 = vmatpush2.msra.mxu0 0.0
    %656 = vmatprep.subr.mxu0 0.0
    %657 = vmatpush2.msra.mxu0 0.0
    %658 = vmatprep.subr.mxu0 0.0
    %659 = vmatpush2.msra.mxu0 0.0
    %660 = vmatprep.subr.mxu0 0.0
    %661 = vmatpush2.msra.mxu0 0.0
    %662 = vmatprep.subr.mxu0 0.0
    %663 = vmatpush2.msra.mxu0 0.0
    %664 = vmatprep.subr.mxu0 0.0
    %665 = vmatpush2.msra.mxu0 0.0
    %666 = vmatprep.mubr.f32.mxu0 0.0
    %667 = vmatmul.mubr.f32.gmra.mxu0 %v387
    %v668 = vpop.f32.mrf.mxu0
    %v669 = vadd.f32 0.0, %v668
    %v670 = vpop.f32.mrf.mxu0
    %v671 = vadd.f32 0.0, %v670
    %672 = vdwg.mxu0
    %673 = vst [vmem:[#allocation10] sm:$0xff] %v456
    %674 = vst [vmem:[#allocation10 + $0x8] sm:$0xff] %v458
    %675 = vst [vmem:[#allocation10 + $0x10] sm:$0xff] %v527
    %676 = vst [vmem:[#allocation10 + $0x18] sm:$0xff] %v529
    %677 = vst [vmem:[#allocation10 + $0x20] sm:$0xff] %v598
    %678 = vst [vmem:[#allocation10 + $0x28] sm:$0xff] %v600
    %679 = vst [vmem:[#allocation10 + $0x30] sm:$0xff] %v669
    %680 = vst [vmem:[#allocation10 + $0x38] sm:$0xff] %v671
    // Predicated region
    $region34: #{tpu_custom_call.1} parent=1 // pred_check
      _
    $region35: #{tpu_custom_call.1} parent=1 // pred_check_branch
      %682 = sbr.rel (0) target = $region37
    $region36: #{tpu_custom_call.1} parent=1 // pred_region
      %s684 = ssub.s32 1024, 1024
      %685 = vsyncadd [#allocation4], %s684
      %s687 = sshll.u32 [#allocation10], 4
      %s688 = int_to_ptr.vmem [resolvable:$true] %s687
      %690 = dma.vmem_to_hbm [thread:$0]  %s688, 1024, %s4, [#allocation4]
    $region37: #{tpu_custom_call.1} parent=1 // pred_fallthru
      _
    // Predicated region
    $region38: #{tpu_custom_call.1} parent=1 // pred_check
      _
    $region39: #{tpu_custom_call.1} parent=1 // pred_check_branch
      %692 = sbr.rel (0) target = $region41
    $region40: #{tpu_custom_call.1} parent=1 // pred_region
      %693 = dma.done [#allocation4], 1024
    $region41: #{tpu_custom_call.1} parent=1 // pred_fallthru
      _
    %694 = vsyncpa [#allocation3], 1
    %695 = vsyncpa [#allocation6], 1
    %696 = vsyncpa [#allocation9], 1
    %697 = vsyncpa [#allocation4], 1

</llo_original>
